<compile_context>
chip_gen: v6e
topology: v6e:2x2x1
jax: 0.10.0
libtpu: 0.0.40
codegen_flags: <defaults>
</compile_context>

<pallas_src>
import math
import jax
import jax.numpy as jnp
from jax import lax
from jax.experimental import pallas as pl
from jax.experimental.pallas import tpu as pltpu

NOISE_SIZE = 32
KGE_SIZE = 32
PATTERN_NUM = 32
HOURS = 24          # hours_in_weekday_patterns.shape[1]
LN_EPS = 1e-5
_SQRT_2_OVER_PI = math.sqrt(2.0 / math.pi)


def _layernorm_cols(h, gamma, beta):
    """LayerNorm over the feature axis (axis 0) of a (F, TB) tile."""
    mu = jnp.mean(h, axis=0, keepdims=True)
    d = h - mu                                    # computed once, reused
    var = jnp.mean(d * d, axis=0, keepdims=True)
    return d * lax.rsqrt(var + LN_EPS) * gamma + beta


def generator_kernel(xT_ref, w1_ref, b1_ref, g1_ref, be1_ref,
                     patT_ref, g2_ref, be2_ref, outT_ref):
    xT = xT_ref[...].astype(jnp.float32)          # (64, TB)  batch on lanes

    # Linear: h^T = W1 @ x^T + b1        -> (32, TB)
    h = jnp.dot(w1_ref[...].astype(jnp.float32), xT,
                preferred_element_type=jnp.float32) + b1_ref[...]

    # LayerNorm(pattern_num), per column (per batch sample)
    hn = _layernorm_cols(h, g1_ref[...], be1_ref[...])

    # Softmax over the feature axis (axis 0); denominator reciprocal on EUP.
    m = jnp.max(hn, axis=0, keepdims=True)
    e = jnp.exp(hn - m)
    p = e * pl.reciprocal(jnp.sum(e, axis=0, keepdims=True), approx=True)

    # y^T = patterns^T @ x_p^T           -> (24, TB)
    y = jnp.dot(patT_ref[...].astype(jnp.float32), p,
                preferred_element_type=jnp.float32)

    # LayerNorm(hours), per column
    yn = _layernorm_cols(y, g2_ref[...], be2_ref[...])

    # GELU (tanh approximation -> native EUP tanh instead of a VALU erf poly).
    out = 0.5 * yn * (1.0 + jnp.tanh(_SQRT_2_OVER_PI * (yn + 0.044715 * yn * yn * yn)))
    outT_ref[...] = out.astype(outT_ref.dtype)


def _round_up(n, m):
    return pl.cdiv(n, m) * m


def generator_p_hd_sum(x, w1, b1, g1, be1, patterns, g2, be2, *, tb_max=2048):
    """x: (B, 64); w1: (32, 64) PyTorch Linear weight (out, in); 1-D params as given."""
    B, IN = x.shape
    P, H = patterns.shape                         # (32, 24)

    # Batch tile on lanes: multiple of 128, capped so the double-buffered
    # (64 + 24) * TB * 4B tiles stay a tiny fraction of VMEM on every chip
    # (v7x has only 64 MiB physical / 32 MiB scoped-default VMEM).
    TB = min(tb_max, _round_up(B, 128))
    Bp = _round_up(B, TB)

    # Layout plumbing: batch-on-lanes (feature-major) operands.  Zero-padded
    # tail columns compute harmless finite values and are sliced off below.
    xT = jnp.pad(x.T, ((0, 0), (0, Bp - B)))      # (64, Bp)
    b1c, g1c, be1c = (a.reshape(P, 1).astype(jnp.float32) for a in (b1, g1, be1))
    g2c, be2c = (a.reshape(H, 1).astype(jnp.float32) for a in (g2, be2))
    patT = patterns.T.astype(jnp.float32)         # (24, 32)

    # Constant index_map -> params DMA'd once, VMEM-resident across grid steps.
    param_spec = lambda a: pl.BlockSpec(a.shape, lambda i: (0, 0))

    outT = pl.pallas_call(
        generator_kernel,
        out_shape=jax.ShapeDtypeStruct((H, Bp), x.dtype),
        grid=(Bp // TB,),
        in_specs=[pl.BlockSpec((IN, TB), lambda i: (0, i)),
                  param_spec(w1), param_spec(b1c), param_spec(g1c),
                  param_spec(be1c), param_spec(patT), param_spec(g2c),
                  param_spec(be2c)],
        out_specs=pl.BlockSpec((H, TB), lambda i: (0, i)),
        compiler_params=pltpu.CompilerParams(
            dimension_semantics=("parallel",),        # megacore split on v7x
            vmem_limit_bytes=32 * 1024 * 1024),
    )(xT, w1, b1c, g1c, be1c, patT, g2c, be2c)

    return outT[:, :B].T                          # back to (B, 24)


def reference(x, w1, b1, g1, be1, patterns, g2, be2):
    """Pure-JAX exact reference (erf GELU, exact division), PyTorch semantics."""
    h = x @ w1.T + b1
    mu = h.mean(-1, keepdims=True)
    var = ((h - mu) ** 2).mean(-1, keepdims=True)
    hn = (h - mu) / jnp.sqrt(var + LN_EPS) * g1 + be1
    p = jax.nn.softmax(hn, axis=-1)
    y = p @ patterns
    mu2 = y.mean(-1, keepdims=True)
    var2 = ((y - mu2) ** 2).mean(-1, keepdims=True)
    yn = (y - mu2) / jnp.sqrt(var2 + LN_EPS) * g2 + be2
    return 0.5 * yn * (1.0 + lax.erf(yn / math.sqrt(2.0)))


if __name__ == "__main__":
    key = jax.random.PRNGKey(0)
    k_x, k_w, k_b, k_p = jax.random.split(key, 4)

    B = 8
    IN = NOISE_SIZE + KGE_SIZE          # 64 (USE_KGE=True)

    # Deterministic "synthetic checkpoint" parameters.
    x = jax.random.normal(k_x, (B, IN), dtype=jnp.float32)
    bound = 1.0 / math.sqrt(IN)
    w1 = jax.random.uniform(k_w, (PATTERN_NUM, IN), minval=-bound, maxval=bound,
                            dtype=jnp.float32)    # PyTorch Linear weight (out, in)
    b1 = jax.random.uniform(k_b, (PATTERN_NUM,), minval=-bound, maxval=bound,
                            dtype=jnp.float32)
    g1 = jnp.ones((PATTERN_NUM,), jnp.float32)    # LayerNorm(pattern_num)
    be1 = jnp.zeros((PATTERN_NUM,), jnp.float32)
    patterns = jax.random.normal(k_p, (PATTERN_NUM, HOURS), dtype=jnp.float32)
    g2 = jnp.ones((HOURS,), jnp.float32)          # LayerNorm(hours)
    be2 = jnp.zeros((HOURS,), jnp.float32)

    out = generator_p_hd_sum(x, w1, b1, g1, be1, patterns, g2, be2)
    jax.block_until_ready(out)

    ref = reference(x, w1, b1, g1, be1, patterns, g2, be2)
    assert out.shape == (B, HOURS)
    # tanh-GELU / approx-reciprocal per perf review -> tolerance loosened to 2e-3.
    # (The reciprocal approximation cancels exactly in the second LayerNorm;
    #  tanh-GELU deviates from exact erf-GELU by < ~3e-4 in absolute value.)
    assert jnp.allclose(out, ref, atol=2e-3, rtol=2e-3), "mismatch vs pure-JAX reference"

    print("KERNEL_OK")
</pallas_src>

<mosaic_0001>
module attributes {stable_mosaic.version = 11 : i64} {
  func.func @generator_kernel(%arg0: i32, %arg1: memref<64x128xf32, #tpu.memory_space<vmem>>, %arg2: memref<32x64xf32, #tpu.memory_space<vmem>>, %arg3: memref<32x1xf32, #tpu.memory_space<vmem>>, %arg4: memref<32x1xf32, #tpu.memory_space<vmem>>, %arg5: memref<32x1xf32, #tpu.memory_space<vmem>>, %arg6: memref<24x32xf32, #tpu.memory_space<vmem>>, %arg7: memref<24x1xf32, #tpu.memory_space<vmem>>, %arg8: memref<24x1xf32, #tpu.memory_space<vmem>>, %arg9: memref<24x128xf32, #tpu.memory_space<vmem>>) attributes {dimension_semantics = [#tpu.dimension_semantics<parallel>], iteration_bounds = array<i64: 1>, scalar_prefetch = 0 : i64, scratch_operands = 0 : i64, tpu.core_type = #tpu.core_type<tc>, window_params = [{transform_indices = @transform_0, window_bounds = array<i64: 64, 128>}, {pipeline_mode = #tpu.pipeline_mode<synchronous>, transform_indices = @transform_1, window_bounds = array<i64: 32, 64>}, {pipeline_mode = #tpu.pipeline_mode<synchronous>, transform_indices = @transform_2, window_bounds = array<i64: 32, 1>}, {pipeline_mode = #tpu.pipeline_mode<synchronous>, transform_indices = @transform_3, window_bounds = array<i64: 32, 1>}, {pipeline_mode = #tpu.pipeline_mode<synchronous>, transform_indices = @transform_4, window_bounds = array<i64: 32, 1>}, {pipeline_mode = #tpu.pipeline_mode<synchronous>, transform_indices = @transform_5, window_bounds = array<i64: 24, 32>}, {pipeline_mode = #tpu.pipeline_mode<synchronous>, transform_indices = @transform_6, window_bounds = array<i64: 24, 1>}, {pipeline_mode = #tpu.pipeline_mode<synchronous>, transform_indices = @transform_7, window_bounds = array<i64: 24, 1>}, {transform_indices = @transform_8, window_bounds = array<i64: 24, 128>}]} {
    %c0 = arith.constant 0 : index
    %c0_0 = arith.constant 0 : index
    %0 = vector.load %arg1[%c0, %c0_0] : memref<64x128xf32, #tpu.memory_space<vmem>>, vector<64x128xf32>
    %c0_1 = arith.constant 0 : index
    %c0_2 = arith.constant 0 : index
    %1 = vector.load %arg2[%c0_1, %c0_2] : memref<32x64xf32, #tpu.memory_space<vmem>>, vector<32x64xf32>
    %cst = arith.constant dense<0.000000e+00> : vector<32x128xf32>
    %2 = tpu.matmul %1, %0, %cst {dimension_numbers = #tpu.dot_dimension_numbers<[1], [0], [0], [1], [0, 0, 1, 1], [], []>} : vector<32x64xf32>, vector<64x128xf32>, vector<32x128xf32> -> vector<32x128xf32>
    %c0_3 = arith.constant 0 : index
    %c0_4 = arith.constant 0 : index
    %3 = vector.load %arg3[%c0_3, %c0_4] : memref<32x1xf32, #tpu.memory_space<vmem>>, vector<32x1xf32>
    %4 = vector.broadcast %3 : vector<32x1xf32> to vector<32x128xf32>
    %5 = arith.addf %2, %4 : vector<32x128xf32>
    %c0_5 = arith.constant 0 : index
    %c0_6 = arith.constant 0 : index
    %6 = vector.load %arg4[%c0_5, %c0_6] : memref<32x1xf32, #tpu.memory_space<vmem>>, vector<32x1xf32>
    %c0_7 = arith.constant 0 : index
    %c0_8 = arith.constant 0 : index
    %7 = vector.load %arg5[%c0_7, %c0_8] : memref<32x1xf32, #tpu.memory_space<vmem>>, vector<32x1xf32>
    %cst_9 = arith.constant dense<0.000000e+00> : vector<128xf32>
    %8 = vector.multi_reduction <add>, %5, %cst_9 [0] : vector<32x128xf32> to vector<128xf32>
    %9 = vector.shape_cast %8 : vector<128xf32> to vector<1x128xf32>
    %cst_10 = arith.constant 3.200000e+01 : f32
    %10 = vector.broadcast %cst_10 : f32 to vector<1x128xf32>
    %11 = arith.divf %9, %10 : vector<1x128xf32>
    %12 = vector.broadcast %11 : vector<1x128xf32> to vector<32x128xf32>
    %13 = arith.subf %5, %12 : vector<32x128xf32>
    %14 = arith.mulf %13, %13 : vector<32x128xf32>
    %cst_11 = arith.constant dense<0.000000e+00> : vector<128xf32>
    %15 = vector.multi_reduction <add>, %14, %cst_11 [0] : vector<32x128xf32> to vector<128xf32>
    %16 = vector.shape_cast %15 : vector<128xf32> to vector<1x128xf32>
    %cst_12 = arith.constant 3.200000e+01 : f32
    %17 = vector.broadcast %cst_12 : f32 to vector<1x128xf32>
    %18 = arith.divf %16, %17 : vector<1x128xf32>
    %cst_13 = arith.constant 9.99999974E-6 : f32
    %19 = vector.broadcast %cst_13 : f32 to vector<1x128xf32>
    %20 = arith.addf %18, %19 : vector<1x128xf32>
    %21 = math.rsqrt %20 : vector<1x128xf32>
    %22 = vector.broadcast %21 : vector<1x128xf32> to vector<32x128xf32>
    %23 = arith.mulf %13, %22 : vector<32x128xf32>
    %24 = vector.broadcast %6 : vector<32x1xf32> to vector<32x128xf32>
    %25 = arith.mulf %23, %24 : vector<32x128xf32>
    %26 = vector.broadcast %7 : vector<32x1xf32> to vector<32x128xf32>
    %27 = arith.addf %25, %26 : vector<32x128xf32>
    %cst_14 = arith.constant dense<0xFF800000> : vector<128xf32>
    %28 = vector.multi_reduction <maximumf>, %27, %cst_14 [0] : vector<32x128xf32> to vector<128xf32>
    %29 = vector.shape_cast %28 : vector<128xf32> to vector<1x128xf32>
    %30 = vector.broadcast %29 : vector<1x128xf32> to vector<32x128xf32>
    %31 = arith.subf %27, %30 : vector<32x128xf32>
    %32 = math.exp %31 : vector<32x128xf32>
    %cst_15 = arith.constant dense<0.000000e+00> : vector<128xf32>
    %33 = vector.multi_reduction <add>, %32, %cst_15 [0] : vector<32x128xf32> to vector<128xf32>
    %34 = vector.shape_cast %33 : vector<128xf32> to vector<1x128xf32>
    %35 = tpu.reciprocal %34 {approx = true} : vector<1x128xf32> -> vector<1x128xf32>
    %36 = vector.broadcast %35 : vector<1x128xf32> to vector<32x128xf32>
    %37 = arith.mulf %32, %36 : vector<32x128xf32>
    %c0_16 = arith.constant 0 : index
    %c0_17 = arith.constant 0 : index
    %38 = vector.load %arg6[%c0_16, %c0_17] : memref<24x32xf32, #tpu.memory_space<vmem>>, vector<24x32xf32>
    %cst_18 = arith.constant dense<0.000000e+00> : vector<24x128xf32>
    %39 = tpu.matmul %38, %37, %cst_18 {dimension_numbers = #tpu.dot_dimension_numbers<[1], [0], [0], [1], [0, 0, 1, 1], [], []>} : vector<24x32xf32>, vector<32x128xf32>, vector<24x128xf32> -> vector<24x128xf32>
    %c0_19 = arith.constant 0 : index
    %c0_20 = arith.constant 0 : index
    %40 = vector.load %arg7[%c0_19, %c0_20] : memref<24x1xf32, #tpu.memory_space<vmem>>, vector<24x1xf32>
    %c0_21 = arith.constant 0 : index
    %c0_22 = arith.constant 0 : index
    %41 = vector.load %arg8[%c0_21, %c0_22] : memref<24x1xf32, #tpu.memory_space<vmem>>, vector<24x1xf32>
    %cst_23 = arith.constant dense<0.000000e+00> : vector<128xf32>
    %42 = vector.multi_reduction <add>, %39, %cst_23 [0] : vector<24x128xf32> to vector<128xf32>
    %43 = vector.shape_cast %42 : vector<128xf32> to vector<1x128xf32>
    %cst_24 = arith.constant 2.400000e+01 : f32
    %44 = vector.broadcast %cst_24 : f32 to vector<1x128xf32>
    %45 = arith.divf %43, %44 : vector<1x128xf32>
    %46 = vector.broadcast %45 : vector<1x128xf32> to vector<24x128xf32>
    %47 = arith.subf %39, %46 : vector<24x128xf32>
    %48 = arith.mulf %47, %47 : vector<24x128xf32>
    %cst_25 = arith.constant dense<0.000000e+00> : vector<128xf32>
    %49 = vector.multi_reduction <add>, %48, %cst_25 [0] : vector<24x128xf32> to vector<128xf32>
    %50 = vector.shape_cast %49 : vector<128xf32> to vector<1x128xf32>
    %cst_26 = arith.constant 2.400000e+01 : f32
    %51 = vector.broadcast %cst_26 : f32 to vector<1x128xf32>
    %52 = arith.divf %50, %51 : vector<1x128xf32>
    %cst_27 = arith.constant 9.99999974E-6 : f32
    %53 = vector.broadcast %cst_27 : f32 to vector<1x128xf32>
    %54 = arith.addf %52, %53 : vector<1x128xf32>
    %55 = math.rsqrt %54 : vector<1x128xf32>
    %56 = vector.broadcast %55 : vector<1x128xf32> to vector<24x128xf32>
    %57 = arith.mulf %47, %56 : vector<24x128xf32>
    %58 = vector.broadcast %40 : vector<24x1xf32> to vector<24x128xf32>
    %59 = arith.mulf %57, %58 : vector<24x128xf32>
    %60 = vector.broadcast %41 : vector<24x1xf32> to vector<24x128xf32>
    %61 = arith.addf %59, %60 : vector<24x128xf32>
    %cst_28 = arith.constant 5.000000e-01 : f32
    %62 = vector.broadcast %cst_28 : f32 to vector<24x128xf32>
    %63 = arith.mulf %62, %61 : vector<24x128xf32>
    %cst_29 = arith.constant 4.471500e-02 : f32
    %64 = vector.broadcast %cst_29 : f32 to vector<24x128xf32>
    %65 = arith.mulf %64, %61 : vector<24x128xf32>
    %66 = arith.mulf %65, %61 : vector<24x128xf32>
    %67 = arith.mulf %66, %61 : vector<24x128xf32>
    %68 = arith.addf %61, %67 : vector<24x128xf32>
    %cst_30 = arith.constant 0.797884583 : f32
    %69 = vector.broadcast %cst_30 : f32 to vector<24x128xf32>
    %70 = arith.mulf %69, %68 : vector<24x128xf32>
    %71 = math.tanh %70 : vector<24x128xf32>
    %cst_31 = arith.constant 1.000000e+00 : f32
    %72 = vector.broadcast %cst_31 : f32 to vector<24x128xf32>
    %73 = arith.addf %72, %71 : vector<24x128xf32>
    %74 = arith.mulf %63, %73 : vector<24x128xf32>
    %c0_32 = arith.constant 0 : index
    %c0_33 = arith.constant 0 : index
    %75 = vector.load %arg9[%c0_32, %c0_33] : memref<24x128xf32, #tpu.memory_space<vmem>>, vector<24x128xf32>
    tpu.vector_store %arg9[%c0_32, %c0_33], %74 {strides = array<i32>} : memref<24x128xf32, #tpu.memory_space<vmem>>, vector<24x128xf32>,
    return
  }
  func.func @transform_0(%arg0: i32) -> (i32, i32) {
    %c0_i32 = arith.constant 0 : i32
    %c0_i32_0 = arith.constant 0 : i32
    return %c0_i32, %arg0 : i32, i32
  }
  func.func @transform_1(%arg0: i32) -> (i32, i32) {
    %c0_i32 = arith.constant 0 : i32
    %c0_i32_0 = arith.constant 0 : i32
    %c0_i32_1 = arith.constant 0 : i32
    return %c0_i32, %c0_i32_0 : i32, i32
  }
  func.func @transform_2(%arg0: i32) -> (i32, i32) {
    %c0_i32 = arith.constant 0 : i32
    %c0_i32_0 = arith.constant 0 : i32
    %c0_i32_1 = arith.constant 0 : i32
    return %c0_i32, %c0_i32_0 : i32, i32
  }
  func.func @transform_3(%arg0: i32) -> (i32, i32) {
    %c0_i32 = arith.constant 0 : i32
    %c0_i32_0 = arith.constant 0 : i32
    %c0_i32_1 = arith.constant 0 : i32
    return %c0_i32, %c0_i32_0 : i32, i32
  }
  func.func @transform_4(%arg0: i32) -> (i32, i32) {
    %c0_i32 = arith.constant 0 : i32
    %c0_i32_0 = arith.constant 0 : i32
    %c0_i32_1 = arith.constant 0 : i32
    return %c0_i32, %c0_i32_0 : i32, i32
  }
  func.func @transform_5(%arg0: i32) -> (i32, i32) {
    %c0_i32 = arith.constant 0 : i32
    %c0_i32_0 = arith.constant 0 : i32
    %c0_i32_1 = arith.constant 0 : i32
    return %c0_i32, %c0_i32_0 : i32, i32
  }
  func.func @transform_6(%arg0: i32) -> (i32, i32) {
    %c0_i32 = arith.constant 0 : i32
    %c0_i32_0 = arith.constant 0 : i32
    %c0_i32_1 = arith.constant 0 : i32
    return %c0_i32, %c0_i32_0 : i32, i32
  }
  func.func @transform_7(%arg0: i32) -> (i32, i32) {
    %c0_i32 = arith.constant 0 : i32
    %c0_i32_0 = arith.constant 0 : i32
    %c0_i32_1 = arith.constant 0 : i32
    return %c0_i32, %c0_i32_0 : i32, i32
  }
  func.func @transform_8(%arg0: i32) -> (i32, i32) {
    %c0_i32 = arith.constant 0 : i32
    %c0_i32_0 = arith.constant 0 : i32
    return %c0_i32, %arg0 : i32, i32
  }
}

</mosaic_0001>

<llo_original>
// kernel: tpu_custom_call.1
$region0: #{tpu_custom_call.1}
  #allocation0 [shape = 'u32[]', space=smem, size = 0x4, offset = 0x4, fixed_abs, tag = 'smem constant byte address 0x4 - core index']
  #allocation1 [shape = 'u32[144,128]{1,0:T(1,128)}', space=vmem, size = 0x12000, scoped, tag = 'internal scratch']
  %s0 = inlined_call_operand.vmem [shape: f32[64,128], index: 0, kind: input, shape index: {}]
  %s1 = inlined_call_operand.vmem [shape: f32[32,64], index: 1, kind: input, shape index: {}]
  %s2 = inlined_call_operand.vmem [shape: f32[32,1], index: 2, kind: input, shape index: {}]
  %s3 = inlined_call_operand.vmem [shape: f32[32,1], index: 3, kind: input, shape index: {}]
  %s4 = inlined_call_operand.vmem [shape: f32[32,1], index: 4, kind: input, shape index: {}]
  %s5 = inlined_call_operand.vmem [shape: f32[24,32], index: 5, kind: input, shape index: {}]
  %s6 = inlined_call_operand.vmem [shape: f32[24,1], index: 6, kind: input, shape index: {}]
  %s7 = inlined_call_operand.vmem [shape: f32[24,1], index: 7, kind: input, shape index: {}]
  %s8 = inlined_call_operand.hbm [shape: f32[24,128], index: 8, kind: output, shape index: {}]
  %s9 = sld [smem:[#allocation0]]
  $region42: #{tpu_custom_call.1} parent=0
    _
  %s11 = ssub.s32 1, %s9
  %s12 = scalar_select 0, %s11, %s9
  $region1: #{tpu_custom_call.1} parent=0
    #allocation2 [shape = 'u8[12288]{0}', space=vmem, size = 0x3000, scoped, tag = 'output window, operand 0, single buffered']
    #allocation3 [shape = 's32[1]{0}', space=sflag, size = 0x4, scoped, tag = 'scoped memory for tpu_custom_call.1']
    %13 = vsyncpa [#allocation3], 0
    // Predicated region
    $region2: #{tpu_custom_call.1} parent=1 // pred_check
      _
    $region3: #{tpu_custom_call.1} parent=1 // pred_check_branch
      %15 = sbr.rel (0) target = $region5
    $region4: #{tpu_custom_call.1} parent=1 // pred_region
      _
    $region5: #{tpu_custom_call.1} parent=1 // pred_fallthru
      _
    // Predicated region
    $region6: #{tpu_custom_call.1} parent=1 // pred_check
      _
    $region7: #{tpu_custom_call.1} parent=1 // pred_check_branch
      %17 = sbr.rel (0) target = $region9
    $region8: #{tpu_custom_call.1} parent=1 // pred_region
      _
    $region9: #{tpu_custom_call.1} parent=1 // pred_fallthru
      _
    // Predicated region
    $region10: #{tpu_custom_call.1} parent=1 // pred_check
      _
    $region11: #{tpu_custom_call.1} parent=1 // pred_check_branch
      %19 = sbr.rel (0) target = $region13
    $region12: #{tpu_custom_call.1} parent=1 // pred_region
      _
    $region13: #{tpu_custom_call.1} parent=1 // pred_fallthru
      _
    // Predicated region
    $region14: #{tpu_custom_call.1} parent=1 // pred_check
      _
    $region15: #{tpu_custom_call.1} parent=1 // pred_check_branch
      %21 = sbr.rel (0) target = $region17
    $region16: #{tpu_custom_call.1} parent=1 // pred_region
      _
    $region17: #{tpu_custom_call.1} parent=1 // pred_fallthru
      _
    // Predicated region
    $region18: #{tpu_custom_call.1} parent=1 // pred_check
      _
    $region19: #{tpu_custom_call.1} parent=1 // pred_check_branch
      %23 = sbr.rel (0) target = $region21
    $region20: #{tpu_custom_call.1} parent=1 // pred_region
      _
    $region21: #{tpu_custom_call.1} parent=1 // pred_fallthru
      _
    // Predicated region
    $region22: #{tpu_custom_call.1} parent=1 // pred_check
      _
    $region23: #{tpu_custom_call.1} parent=1 // pred_check_branch
      %25 = sbr.rel (0) target = $region25
    $region24: #{tpu_custom_call.1} parent=1 // pred_region
      _
    $region25: #{tpu_custom_call.1} parent=1 // pred_fallthru
      _
    // Predicated region
    $region26: #{tpu_custom_call.1} parent=1 // pred_check
      _
    $region27: #{tpu_custom_call.1} parent=1 // pred_check_branch
      %27 = sbr.rel (0) target = $region29
    $region28: #{tpu_custom_call.1} parent=1 // pred_region
      _
    $region29: #{tpu_custom_call.1} parent=1 // pred_fallthru
      _
    // Predicated region
    $region30: #{tpu_custom_call.1} parent=1 // pred_check
      _
    $region31: #{tpu_custom_call.1} parent=1 // pred_check_branch
      %29 = sbr.rel (0) target = $region33
    $region32: #{tpu_custom_call.1} parent=1 // pred_region
      _
    $region33: #{tpu_custom_call.1} parent=1 // pred_fallthru
      _
    %v30 = vld [vmem:[%s0] sm:$0xff]
    %v31 = vld [vmem:[%s0 + $0x8] sm:$0xff]
    %v32 = vld [vmem:[%s0 + $0x10] sm:$0xff]
    %v33 = vld [vmem:[%s0 + $0x18] sm:$0xff]
    %v34 = vld [vmem:[%s0 + $0x20] sm:$0xff]
    %v35 = vld [vmem:[%s0 + $0x28] sm:$0xff]
    %v36 = vld [vmem:[%s0 + $0x30] sm:$0xff]
    %v37 = vld [vmem:[%s0 + $0x38] sm:$0xff]
    %v38 = vld [vmem:[%s1] sm:$0xff]
    %v39 = vld [vmem:[%s1 + $0x8] sm:$0xff]
    %v40 = vld [vmem:[%s1 + $0x10] sm:$0xff]
    %v41 = vld [vmem:[%s1 + $0x18] sm:$0xff]
    %v42 = vld [vmem:[%s2] sm:$0xff]
    %v43 = vld [vmem:[%s2 + $0x8] sm:$0xff]
    %v44 = vld [vmem:[%s2 + $0x10] sm:$0xff]
    %v45 = vld [vmem:[%s2 + $0x18] sm:$0xff]
    %47 = vset.pattern.permute.xlu0 0
    %48 = vperm.xlu0 %47, %v42
    %v49 = vpop.permute.xlu0 %48
    %52 = vset.pattern.permute.xlu0 0
    %53 = vperm.xlu0 %52, %v43
    %v54 = vpop.permute.xlu0 %53
    %57 = vset.pattern.permute.xlu0 0
    %58 = vperm.xlu0 %57, %v44
    %v59 = vpop.permute.xlu0 %58
    %62 = vset.pattern.permute.xlu0 0
    %63 = vperm.xlu0 %62, %v45
    %v64 = vpop.permute.xlu0 %63
    %vm66 = vcmask 523264
    %v68 = vsel %vm66, %v38, 0
    %v71 = vsel %vm66, %v39, 0
    %v74 = vsel %vm66, %v40, 0
    %v77 = vsel %vm66, %v41, 0
    %79 = vmatprep.subr.mxu0 0.0
    %80 = vmatpush1.msra.mxu0 0.0
    %81 = vmatprep.subr.mxu0 0.0
    %82 = vmatpush1.msra.mxu0 0.0
    %83 = vmatprep.subr.mxu0 0.0
    %84 = vmatpush1.msra.mxu0 0.0
    %85 = vmatprep.subr.mxu0 0.0
    %86 = vmatpush1.msra.mxu0 0.0
    %87 = vmatprep.subr.mxu0 0.0
    %88 = vmatpush1.msra.mxu0 0.0
    %89 = vmatprep.subr.mxu0 0.0
    %90 = vmatpush1.msra.mxu0 0.0
    %91 = vmatprep.subr.mxu0 0.0
    %92 = vmatpush1.msra.mxu0 0.0
    %93 = vmatprep.subr.mxu0 0.0
    %94 = vmatpush1.msra.mxu0 0.0
    %95 = vmatprep.subr.mxu0 0.0
    %96 = vmatpush1.msra.mxu0 %v37
    %97 = vmatprep.subr.mxu0 0.0
    %98 = vmatpush1.msra.mxu0 %v36
    %99 = vmatprep.subr.mxu0 0.0
    %100 = vmatpush1.msra.mxu0 %v35
    %101 = vmatprep.subr.mxu0 0.0
    %102 = vmatpush1.msra.mxu0 %v34
    %103 = vmatprep.subr.mxu0 0.0
    %104 = vmatpush1.msra.mxu0 %v33
    %105 = vmatprep.subr.mxu0 0.0
    %106 = vmatpush1.msra.mxu0 %v32
    %107 = vmatprep.subr.mxu0 0.0
    %108 = vmatpush1.msra.mxu0 %v31
    %109 = vmatprep.subr.mxu0 0.0
    %110 = vmatpush1.msra.mxu0 %v30
    %111 = vmatprep.subr.mxu0 0.0
    %112 = vmatpush2.msra.mxu0 0.0
    %113 = vmatprep.subr.mxu0 0.0
    %114 = vmatpush2.msra.mxu0 0.0
    %115 = vmatprep.subr.mxu0 0.0
    %116 = vmatpush2.msra.mxu0 0.0
    %117 = vmatprep.subr.mxu0 0.0
    %118 = vmatpush2.msra.mxu0 0.0
    %119 = vmatprep.subr.mxu0 0.0
    %120 = vmatpush2.msra.mxu0 0.0
    %121 = vmatprep.subr.mxu0 0.0
    %122 = vmatpush2.msra.mxu0 0.0
    %123 = vmatprep.subr.mxu0 0.0
    %124 = vmatpush2.msra.mxu0 0.0
    %125 = vmatprep.subr.mxu0 0.0
    %126 = vmatpush2.msra.mxu0 0.0
    %127 = vmatprep.subr.mxu0 0.0
    %128 = vmatpush2.msra.mxu0 0.0
    %129 = vmatprep.subr.mxu0 0.0
    %130 = vmatpush2.msra.mxu0 0.0
    %131 = vmatprep.subr.mxu0 0.0
    %132 = vmatpush2.msra.mxu0 0.0
    %133 = vmatprep.subr.mxu0 0.0
    %134 = vmatpush2.msra.mxu0 0.0
    %135 = vmatprep.subr.mxu0 0.0
    %136 = vmatpush2.msra.mxu0 0.0
    %137 = vmatprep.subr.mxu0 0.0
    %138 = vmatpush2.msra.mxu0 0.0
    %139 = vmatprep.subr.mxu0 0.0
    %140 = vmatpush2.msra.mxu0 0.0
    %141 = vmatprep.subr.mxu0 0.0
    %142 = vmatpush2.msra.mxu0 0.0
    %143 = vmatprep.mubr.f32.mxu0 0.0
    %144 = vmatmul.mubr.f32.gmra.mxu0 %v68
    %v145 = vpop.f32.mrf.mxu0
    %v146 = vadd.f32 %v49, %v145
    %v147 = vpop.f32.mrf.mxu0
    %148 = vmatprep.mubr.f32.mxu0 0.0
    %149 = vmatmul.mubr.f32.gmra.mxu0 %v71
    %v150 = vpop.f32.mrf.mxu0
    %v151 = vadd.f32 %v54, %v150
    %v152 = vpop.f32.mrf.mxu0
    %153 = vmatprep.mubr.f32.mxu0 0.0
    %154 = vmatmul.mubr.f32.gmra.mxu0 %v74
    %v155 = vpop.f32.mrf.mxu0
    %v156 = vadd.f32 %v59, %v155
    %v157 = vpop.f32.mrf.mxu0
    %158 = vmatprep.mubr.f32.mxu0 0.0
    %159 = vmatmul.mubr.f32.gmra.mxu0 %v77
    %v160 = vpop.f32.mrf.mxu0
    %v161 = vadd.f32 %v64, %v160
    %v162 = vpop.f32.mrf.mxu0
    %163 = vdwg.mxu0
    %v164 = vld [vmem:[%s3] sm:$0xff]
    %v165 = vld [vmem:[%s3 + $0x8] sm:$0xff]
    %v166 = vld [vmem:[%s3 + $0x10] sm:$0xff]
    %v167 = vld [vmem:[%s3 + $0x18] sm:$0xff]
    %v168 = vld [vmem:[%s4] sm:$0xff]
    %v169 = vld [vmem:[%s4 + $0x8] sm:$0xff]
    %v170 = vld [vmem:[%s4 + $0x10] sm:$0xff]
    %v171 = vld [vmem:[%s4 + $0x18] sm:$0xff]
    %v172 = vadd.f32 %v146, %v151
    %v173 = vadd.f32 %v172, %v156
    %v174 = vadd.f32 %v173, %v161
    %v175 = vrot.slane %v174, 4
    %v176 = vadd.f32 %v174, %v175
    %v177 = vrot.slane %v176, 2
    %v178 = vadd.f32 %v176, %v177
    %v179 = vrot.slane %v178, 1
    %v180 = vadd.f32 %v178, %v179
    %v181 = vrcp.pop 32.0
    %v182 = vmul.f32 %v180, %v181
    %v183 = vsub.f32 %v146, %v182
    %v184 = vsub.f32 %v151, %v182
    %v185 = vsub.f32 %v156, %v182
    %v186 = vsub.f32 %v161, %v182
    %v187 = vmul.f32 %v183, %v183
    %v188 = vmul.f32 %v184, %v184
    %v189 = vmul.f32 %v185, %v185
    %v190 = vmul.f32 %v186, %v186
    %v191 = vadd.f32 %v187, %v188
    %v192 = vadd.f32 %v191, %v189
    %v193 = vadd.f32 %v192, %v190
    %v194 = vrot.slane %v193, 4
    %v195 = vadd.f32 %v193, %v194
    %v196 = vrot.slane %v195, 2
    %v197 = vadd.f32 %v195, %v196
    %v198 = vrot.slane %v197, 1
    %v199 = vadd.f32 %v197, %v198
    %v200 = vmul.f32 %v199, %v181
    %v201 = vadd.f32 %v200, 1e-05
    %v202 = vrsqrt.pop %v201
    %v203 = vmul.f32 %v183, %v202
    %v204 = vmul.f32 %v184, %v202
    %v205 = vmul.f32 %v185, %v202
    %v206 = vmul.f32 %v186, %v202
    %208 = vset.pattern.permute.xlu0 0
    %209 = vperm.xlu0 %208, %v164
    %v210 = vpop.permute.xlu0 %209
    %213 = vset.pattern.permute.xlu0 0
    %214 = vperm.xlu0 %213, %v165
    %v215 = vpop.permute.xlu0 %214
    %218 = vset.pattern.permute.xlu0 0
    %219 = vperm.xlu0 %218, %v166
    %v220 = vpop.permute.xlu0 %219
    %223 = vset.pattern.permute.xlu0 0
    %224 = vperm.xlu0 %223, %v167
    %v225 = vpop.permute.xlu0 %224
    %v227 = vmul.f32 %v203, %v210
    %v228 = vmul.f32 %v204, %v215
    %v229 = vmul.f32 %v205, %v220
    %v230 = vmul.f32 %v206, %v225
    %232 = vset.pattern.permute.xlu0 0
    %233 = vperm.xlu0 %232, %v168
    %v234 = vpop.permute.xlu0 %233
    %237 = vset.pattern.permute.xlu0 0
    %238 = vperm.xlu0 %237, %v169
    %v239 = vpop.permute.xlu0 %238
    %242 = vset.pattern.permute.xlu0 0
    %243 = vperm.xlu0 %242, %v170
    %v244 = vpop.permute.xlu0 %243
    %247 = vset.pattern.permute.xlu0 0
    %248 = vperm.xlu0 %247, %v171
    %v249 = vpop.permute.xlu0 %248
    %v251 = vadd.f32 %v227, %v234
    %v252 = vadd.f32 %v228, %v239
    %v253 = vadd.f32 %v229, %v244
    %v254 = vadd.f32 %v230, %v249
    %v255 = vmax.f32 %v251, %v252
    %v256 = vmax.f32 %v253, %v254
    %v257 = vmax.f32 %v255, %v256
    %v258 = vrot.slane %v257, 4
    %v259 = vmax.f32 %v257, %v258
    %v260 = vrot.slane %v259, 2
    %v261 = vmax.f32 %v259, %v260
    %v262 = vrot.slane %v261, 1
    %v263 = vmax.f32 %v261, %v262
    %v264 = vsub.f32 %v251, %v263
    %v265 = vsub.f32 %v252, %v263
    %v266 = vsub.f32 %v253, %v263
    %v267 = vsub.f32 %v254, %v263
    %v268 = vmul.f32 %v264, 1.442695
    %v269 = vpow.pop %v268
    %v270 = vmul.f32 %v265, 1.442695
    %v271 = vpow.pop %v270
    %v272 = vmul.f32 %v266, 1.442695
    %v273 = vpow.pop %v272
    %v274 = vmul.f32 %v267, 1.442695
    %v275 = vpow.pop %v274
    %v276 = vadd.f32 %v269, %v271
    %v277 = vadd.f32 %v276, %v273
    %v278 = vadd.f32 %v277, %v275
    %v279 = vrot.slane %v278, 4
    %v280 = vadd.f32 %v278, %v279
    %v281 = vrot.slane %v280, 2
    %v282 = vadd.f32 %v280, %v281
    %v283 = vrot.slane %v282, 1
    %v284 = vadd.f32 %v282, %v283
    %v285 = vrcp.pop %v284
    %v286 = vmul.f32 %v269, %v285
    %v287 = vmul.f32 %v271, %v285
    %v288 = vmul.f32 %v273, %v285
    %v289 = vmul.f32 %v275, %v285
    %v290 = vld [vmem:[%s5] sm:$0xff]
    %v291 = vld [vmem:[%s5 + $0x8] sm:$0xff]
    %v292 = vld [vmem:[%s5 + $0x10] sm:$0xff]
    %vm293 = vcmask 261120
    %v295 = vsel %vm293, %v290, 0
    %v298 = vsel %vm293, %v291, 0
    %v301 = vsel %vm293, %v292, 0
    %303 = vmatprep.subr.mxu0 0.0
    %304 = vmatpush1.msra.mxu0 0.0
    %305 = vmatprep.subr.mxu0 0.0
    %306 = vmatpush1.msra.mxu0 0.0
    %307 = vmatprep.subr.mxu0 0.0
    %308 = vmatpush1.msra.mxu0 0.0
    %309 = vmatprep.subr.mxu0 0.0
    %310 = vmatpush1.msra.mxu0 0.0
    %311 = vmatprep.subr.mxu0 0.0
    %312 = vmatpush1.msra.mxu0 0.0
    %313 = vmatprep.subr.mxu0 0.0
    %314 = vmatpush1.msra.mxu0 0.0
    %315 = vmatprep.subr.mxu0 0.0
    %316 = vmatpush1.msra.mxu0 0.0
    %317 = vmatprep.subr.mxu0 0.0
    %318 = vmatpush1.msra.mxu0 0.0
    %319 = vmatprep.subr.mxu0 0.0
    %320 = vmatpush1.msra.mxu0 0.0
    %321 = vmatprep.subr.mxu0 0.0
    %322 = vmatpush1.msra.mxu0 0.0
    %323 = vmatprep.subr.mxu0 0.0
    %324 = vmatpush1.msra.mxu0 0.0
    %325 = vmatprep.subr.mxu0 0.0
    %326 = vmatpush1.msra.mxu0 0.0
    %327 = vmatprep.subr.mxu0 0.0
    %328 = vmatpush1.msra.mxu0 %v289
    %329 = vmatprep.subr.mxu0 0.0
    %330 = vmatpush1.msra.mxu0 %v288
    %331 = vmatprep.subr.mxu0 0.0
    %332 = vmatpush1.msra.mxu0 %v287
    %333 = vmatprep.subr.mxu0 0.0
    %334 = vmatpush1.msra.mxu0 %v286
    %335 = vmatprep.subr.mxu0 0.0
    %336 = vmatpush2.msra.mxu0 0.0
    %337 = vmatprep.subr.mxu0 0.0
    %338 = vmatpush2.msra.mxu0 0.0
    %339 = vmatprep.subr.mxu0 0.0
    %340 = vmatpush2.msra.mxu0 0.0
    %341 = vmatprep.subr.mxu0 0.0
    %342 = vmatpush2.msra.mxu0 0.0
    %343 = vmatprep.subr.mxu0 0.0
    %344 = vmatpush2.msra.mxu0 0.0
    %345 = vmatprep.subr.mxu0 0.0
    %346 = vmatpush2.msra.mxu0 0.0
    %347 = vmatprep.subr.mxu0 0.0
    %348 = vmatpush2.msra.mxu0 0.0
    %349 = vmatprep.subr.mxu0 0.0
    %350 = vmatpush2.msra.mxu0 0.0
    %351 = vmatprep.subr.mxu0 0.0
    %352 = vmatpush2.msra.mxu0 0.0
    %353 = vmatprep.subr.mxu0 0.0
    %354 = vmatpush2.msra.mxu0 0.0
    %355 = vmatprep.subr.mxu0 0.0
    %356 = vmatpush2.msra.mxu0 0.0
    %357 = vmatprep.subr.mxu0 0.0
    %358 = vmatpush2.msra.mxu0 0.0
    %359 = vmatprep.subr.mxu0 0.0
    %360 = vmatpush2.msra.mxu0 0.0
    %361 = vmatprep.subr.mxu0 0.0
    %362 = vmatpush2.msra.mxu0 0.0
    %363 = vmatprep.subr.mxu0 0.0
    %364 = vmatpush2.msra.mxu0 0.0
    %365 = vmatprep.subr.mxu0 0.0
    %366 = vmatpush2.msra.mxu0 0.0
    %367 = vmatprep.mubr.f32.mxu0 0.0
    %368 = vmatmul.mubr.f32.gmra.mxu0 %v295
    %v369 = vpop.f32.mrf.mxu0
    %v370 = vadd.f32 0.0, %v369
    %v371 = vpop.f32.mrf.mxu0
    %372 = vmatprep.mubr.f32.mxu0 0.0
    %373 = vmatmul.mubr.f32.gmra.mxu0 %v298
    %v374 = vpop.f32.mrf.mxu0
    %v375 = vadd.f32 0.0, %v374
    %v376 = vpop.f32.mrf.mxu0
    %377 = vmatprep.mubr.f32.mxu0 0.0
    %378 = vmatmul.mubr.f32.gmra.mxu0 %v301
    %v379 = vpop.f32.mrf.mxu0
    %v380 = vadd.f32 0.0, %v379
    %v381 = vpop.f32.mrf.mxu0
    %382 = vdwg.mxu0
    %v383 = vld [vmem:[%s6] sm:$0xff]
    %v384 = vld [vmem:[%s6 + $0x8] sm:$0xff]
    %v385 = vld [vmem:[%s6 + $0x10] sm:$0xff]
    %v386 = vld [vmem:[%s7] sm:$0xff]
    %v387 = vld [vmem:[%s7 + $0x8] sm:$0xff]
    %v388 = vld [vmem:[%s7 + $0x10] sm:$0xff]
    %v389 = vadd.f32 %v370, %v375
    %v390 = vadd.f32 %v389, %v380
    %v391 = vrot.slane %v390, 4
    %v392 = vadd.f32 %v390, %v391
    %v393 = vrot.slane %v392, 2
    %v394 = vadd.f32 %v392, %v393
    %v395 = vrot.slane %v394, 1
    %v396 = vadd.f32 %v394, %v395
    %v397 = vrcp.pop 24.0
    %v398 = vmul.f32 %v396, %v397
    %v399 = vsub.f32 %v370, %v398
    %v400 = vsub.f32 %v375, %v398
    %v401 = vsub.f32 %v380, %v398
    %v402 = vmul.f32 %v399, %v399
    %v403 = vmul.f32 %v400, %v400
    %v404 = vmul.f32 %v401, %v401
    %v405 = vadd.f32 %v402, %v403
    %v406 = vadd.f32 %v405, %v404
    %v407 = vrot.slane %v406, 4
    %v408 = vadd.f32 %v406, %v407
    %v409 = vrot.slane %v408, 2
    %v410 = vadd.f32 %v408, %v409
    %v411 = vrot.slane %v410, 1
    %v412 = vadd.f32 %v410, %v411
    %v413 = vmul.f32 %v412, %v397
    %v414 = vadd.f32 %v413, 1e-05
    %v415 = vrsqrt.pop %v414
    %v416 = vmul.f32 %v399, %v415
    %v417 = vmul.f32 %v400, %v415
    %v418 = vmul.f32 %v401, %v415
    %420 = vset.pattern.permute.xlu0 0
    %421 = vperm.xlu0 %420, %v383
    %v422 = vpop.permute.xlu0 %421
    %425 = vset.pattern.permute.xlu0 0
    %426 = vperm.xlu0 %425, %v384
    %v427 = vpop.permute.xlu0 %426
    %430 = vset.pattern.permute.xlu0 0
    %431 = vperm.xlu0 %430, %v385
    %v432 = vpop.permute.xlu0 %431
    %v434 = vmul.f32 %v416, %v422
    %v435 = vmul.f32 %v417, %v427
    %v436 = vmul.f32 %v418, %v432
    %438 = vset.pattern.permute.xlu0 0
    %439 = vperm.xlu0 %438, %v386
    %v440 = vpop.permute.xlu0 %439
    %443 = vset.pattern.permute.xlu0 0
    %444 = vperm.xlu0 %443, %v387
    %v445 = vpop.permute.xlu0 %444
    %448 = vset.pattern.permute.xlu0 0
    %449 = vperm.xlu0 %448, %v388
    %v450 = vpop.permute.xlu0 %449
    %v452 = vadd.f32 %v434, %v440
    %v453 = vadd.f32 %v435, %v445
    %v454 = vadd.f32 %v436, %v450
    %v455 = vmul.f32 %v452, 0.5
    %v456 = vmul.f32 %v453, 0.5
    %v457 = vmul.f32 %v454, 0.5
    %v458 = vmul.f32 %v452, 0.044715
    %v459 = vmul.f32 %v453, 0.044715
    %v460 = vmul.f32 %v454, 0.044715
    %v461 = vmul.f32 %v458, %v452
    %v462 = vmul.f32 %v459, %v453
    %v463 = vmul.f32 %v460, %v454
    %v464 = vmul.f32 %v461, %v452
    %v465 = vmul.f32 %v462, %v453
    %v466 = vmul.f32 %v463, %v454
    %v467 = vadd.f32 %v452, %v464
    %v468 = vadd.f32 %v453, %v465
    %v469 = vadd.f32 %v454, %v466
    %v470 = vmul.f32 %v467, 0.7978846
    %v471 = vmul.f32 %v468, 0.7978846
    %v472 = vmul.f32 %v469, 0.7978846
    %v473 = vtanh.pop %v470
    %v474 = vtanh.pop %v471
    %v475 = vtanh.pop %v472
    %v476 = vadd.f32 %v473, 1.0
    %v477 = vadd.f32 %v474, 1.0
    %v478 = vadd.f32 %v475, 1.0
    %v479 = vmul.f32 %v455, %v476
    %v480 = vmul.f32 %v456, %v477
    %v481 = vmul.f32 %v457, %v478
    %482 = vst [vmem:[#allocation2] sm:$0xff] %v479
    %483 = vst [vmem:[#allocation2 + $0x8] sm:$0xff] %v480
    %484 = vst [vmem:[#allocation2 + $0x10] sm:$0xff] %v481
    // Predicated region
    $region34: #{tpu_custom_call.1} parent=1 // pred_check
      _
    $region35: #{tpu_custom_call.1} parent=1 // pred_check_branch
      %486 = sbr.rel (0) target = $region37
    $region36: #{tpu_custom_call.1} parent=1 // pred_region
      %s488 = ssub.s32 384, 384
      %489 = vsyncadd [#allocation3], %s488
      %s490 = sshll.u32 [#allocation2], 4
      %s491 = int_to_ptr.vmem [resolvable:$true] %s490
      %496 = dma.vmem_to_hbm [thread:$0]  %s491, 384, %s8, [#allocation3], 128, 128, 8
    $region37: #{tpu_custom_call.1} parent=1 // pred_fallthru
      _
    // Predicated region
    $region38: #{tpu_custom_call.1} parent=1 // pred_check
      _
    $region39: #{tpu_custom_call.1} parent=1 // pred_check_branch
      %498 = sbr.rel (0) target = $region41
    $region40: #{tpu_custom_call.1} parent=1 // pred_region
      %499 = dma.done [#allocation3], 384
    $region41: #{tpu_custom_call.1} parent=1 // pred_fallthru
      _
    %500 = vsyncpa [#allocation3], 1

</llo_original>
